<compile_context>
chip_gen: v6e
topology: v6e:2x2x1
jax: 0.10.0
libtpu: 0.0.40
codegen_flags: <defaults>
</compile_context>

<pallas_src>
import jax
import jax.numpy as jnp
from jax import lax
from jax.experimental import pallas as pl
from jax.experimental.pallas import tpu as pltpu

_STRIP = 32                      # sublane rows per inner strip (4 f32 vregs)
_TB_GRANULE = _STRIP * 128       # 4096 elements
_MIN_TB = 1024                   # 8 rows x 128 lanes


def _cdiv(a, b):
    return -(-a // b)


def _round_up(n, m):
    return _cdiv(n, m) * m


def mlp_kernel(params_ref, x_ref, o_ref):
    # params_ref: (61,) f32 in SMEM, layout:
    #   [0:40)  w1 (10,4) row-major -> w1[k, j] = params[4*k + j]
    #   [40:50) b1 (10,)
    #   [50:60) w2 (1,10)           -> w2[0, k] = params[50 + k]
    #   [60]    b2
    # x_ref: (4, TSUB, 128) f32 -- feature on axis 0, batch on (sublane, lane)
    # o_ref: (TSUB, 128) f32
    tsub = o_ref.shape[0]
    strip = _STRIP if tsub % _STRIP == 0 else tsub     # static
    n_strips = tsub // strip

    # Hoist the 61 scalar SMEM reads out of the strip loop (loop-invariant).
    w1 = [[params_ref[4 * k + j] for j in range(4)] for k in range(10)]
    b1 = [params_ref[40 + k] for k in range(10)]
    w2 = [params_ref[50 + k] for k in range(10)]
    b2 = params_ref[60]

    def strip_body(s, carry):
        r = s * strip
        if not isinstance(r, int):
            r = pl.multiple_of(r, strip)
        x0 = x_ref[0, pl.ds(r, strip), :]
        x1 = x_ref[1, pl.ds(r, strip), :]
        x2 = x_ref[2, pl.ds(r, strip), :]
        x3 = x_ref[3, pl.ds(r, strip), :]
        z = jnp.full((strip, 128), b2, dtype=jnp.float32)
        # Static unroll over the 10 hidden units: pure VPU multiply-adds (the
        # MXU would force a 4-wide lane layout and blow up HBM traffic).
        for k in range(10):
            h = (x0 * w1[k][0] + x1 * w1[k][1]
                 + x2 * w1[k][2] + x3 * w1[k][3] + b1[k])
            h = jnp.maximum(h, 0.0)            # ReLU
            z = z + h * w2[k]                  # fc2 accumulate
        # sigmoid(z) = 1 / (1 + exp(-z)); exp and the approximate reciprocal
        # both run on the EUP slot, keeping the binding VALU slot clear.
        o_ref[pl.ds(r, strip), :] = pl.reciprocal(1.0 + jnp.exp(-z),
                                                  approx=True)
        return carry

    if n_strips == 1:
        strip_body(0, 0)
    else:
        lax.fori_loop(0, n_strips, strip_body, 0)


def _choose_tiling(batch, max_tb):
    """Return (tile_elems, padded_batch, grid_steps).

    Grid count is chosen first (>= 4 steps once the batch is big enough, and
    enough steps that a tile never exceeds max_tb) so padding waste is bounded
    by one 4096-element granule per step instead of up to a full tile.
    """
    b128 = _round_up(batch, 128)
    if b128 <= _MIN_TB:
        return b128, b128, 1                   # single step, block == full array
    n = max(_cdiv(b128, max_tb), min(4, _cdiv(b128, _TB_GRANULE)))
    tb = _round_up(_cdiv(b128, n), _TB_GRANULE)
    n = _cdiv(b128, tb)
    return tb, n * tb, n


def _batch_dim_semantics():
    # v7x has 2 TensorCores per chip: actually split the batch grid across
    # them.  On single-TC chips (v5e/v6e) plain "parallel" is the safe choice.
    try:
        if "v7" in jax.devices()[0].device_kind.lower():
            return (pltpu.CORE_PARALLEL,)
    except Exception:
        pass
    return ("parallel",)


def dummy_flood_model(x, w1, b1, w2, b2, *, max_tb=262144,
                      x_is_feature_major=False):
    """Forward pass of DummyFloodModel.

    x: (B, 4) f32 (PyTorch layout), or (4, B) if x_is_feature_major=True
       (skips the wrapper-side transpose HBM pass entirely).
    w1: (10, 4); b1: (10,); w2: (1, 10); b2: (1,).
    Returns (B, 1) f32 = sigmoid(relu(x @ w1.T + b1) @ w2.T + b2).
    """
    if x_is_feature_major:
        xt = x.astype(jnp.float32)                      # (4, B), no transpose
        batch = x.shape[1]
    else:
        batch = x.shape[0]
        # Layout plumbing: batch onto the lane axis.  allow_input_fusion below
        # lets XLA fold this (and the pad/reshape) into the pallas input.
        xt = jnp.transpose(x).astype(jnp.float32)       # (4, B)

    tb, bpad, nsteps = _choose_tiling(batch, max_tb)
    tsub = tb // 128

    xt = jnp.pad(xt, ((0, 0), (0, bpad - batch)))       # (4, bpad)
    xt = xt.reshape(4, bpad // 128, 128)

    params = jnp.concatenate(
        [w1.reshape(-1), b1.reshape(-1), w2.reshape(-1), b2.reshape(-1)]
    ).astype(jnp.float32)                               # (61,)

    out = pl.pallas_call(
        mlp_kernel,
        out_shape=jax.ShapeDtypeStruct((bpad // 128, 128), jnp.float32),
        grid=(nsteps,),
        in_specs=[
            pl.BlockSpec(memory_space=pltpu.MemorySpace.SMEM),    # params
            pl.BlockSpec((4, tsub, 128), lambda i: (0, i, 0)),    # x tiles
        ],
        out_specs=pl.BlockSpec((tsub, 128), lambda i: (i, 0)),
        compiler_params=pltpu.CompilerParams(
            dimension_semantics=_batch_dim_semantics(),
            allow_input_fusion=[False, True],
        ),
        cost_estimate=pl.CostEstimate(
            flops=110 * bpad,            # ~110 VPU ops per batch element
            transcendentals=bpad,        # one exp per element
            bytes_accessed=(4 + 1) * 4 * bpad + 61 * 4,
        ),
    )(params, xt)

    return out.reshape(bpad)[:batch].reshape(batch, 1)


def init_params(key):
    """nn.Linear-style init (uniform +/- 1/sqrt(fan_in)), PyTorch layout."""
    k1, k2, k3, k4 = jax.random.split(key, 4)
    bound1 = 1.0 / jnp.sqrt(4.0)
    bound2 = 1.0 / jnp.sqrt(10.0)
    w1 = jax.random.uniform(k1, (10, 4), jnp.float32, -bound1, bound1)
    b1 = jax.random.uniform(k2, (10,), jnp.float32, -bound1, bound1)
    w2 = jax.random.uniform(k3, (1, 10), jnp.float32, -bound2, bound2)
    b2 = jax.random.uniform(k4, (1,), jnp.float32, -bound2, bound2)
    return w1, b1, w2, b2


if __name__ == "__main__":
    key = jax.random.PRNGKey(0)
    kx, kp = jax.random.split(key)
    w1, b1, w2, b2 = init_params(kp)

    def reference(xb):
        return jax.nn.sigmoid(jnp.maximum(xb @ w1.T + b1, 0.0) @ w2.T + b2)

    # Small demo batch (single-step path) and a larger one that exercises the
    # multi-step, strip-mined path.  approx reciprocal -> tolerance 2e-3.
    for batch in (8, 20000):
        xb = jax.random.normal(jax.random.fold_in(kx, batch), (batch, 4),
                               jnp.float32)
        out = jax.block_until_ready(dummy_flood_model(xb, w1, b1, w2, b2))
        assert out.shape == (batch, 1)
        assert jnp.allclose(out, reference(xb), atol=2e-3, rtol=2e-3), \
            f"mismatch vs reference at batch={batch}"

    # Feature-major input path (skips the wrapper-side transpose HBM pass).
    xb = jax.random.normal(kx, (8, 4), jnp.float32)
    out_fm = jax.block_until_ready(
        dummy_flood_model(xb.T, w1, b1, w2, b2, x_is_feature_major=True))
    assert jnp.allclose(out_fm, reference(xb), atol=2e-3, rtol=2e-3)

    print("KERNEL_OK")
</pallas_src>

<mosaic_0001>
module attributes {stable_mosaic.version = 11 : i64} {
  func.func @mlp_kernel(%arg0: i32, %arg1: memref<61xf32, #tpu.memory_space<smem>>, %arg2: memref<4x1x128xf32, #tpu.memory_space<vmem>>, %arg3: memref<1x128xf32, #tpu.memory_space<vmem>>) attributes {dimension_semantics = [#tpu.dimension_semantics<parallel>], iteration_bounds = array<i64: 1>, scalar_prefetch = 0 : i64, scratch_operands = 0 : i64, tpu.core_type = #tpu.core_type<tc>, window_params = [{transform_indices = @transform_0, window_bounds = array<i64: 61>}, {transform_indices = @transform_1, window_bounds = array<i64: 4, 1, 128>}, {transform_indices = @transform_2, window_bounds = array<i64: 1, 128>}]} {
    %c0 = arith.constant 0 : index
    %0 = memref.load %arg1[%c0] : memref<61xf32, #tpu.memory_space<smem>>
    %c1 = arith.constant 1 : index
    %1 = memref.load %arg1[%c1] : memref<61xf32, #tpu.memory_space<smem>>
    %c2 = arith.constant 2 : index
    %2 = memref.load %arg1[%c2] : memref<61xf32, #tpu.memory_space<smem>>
    %c3 = arith.constant 3 : index
    %3 = memref.load %arg1[%c3] : memref<61xf32, #tpu.memory_space<smem>>
    %c4 = arith.constant 4 : index
    %4 = memref.load %arg1[%c4] : memref<61xf32, #tpu.memory_space<smem>>
    %c5 = arith.constant 5 : index
    %5 = memref.load %arg1[%c5] : memref<61xf32, #tpu.memory_space<smem>>
    %c6 = arith.constant 6 : index
    %6 = memref.load %arg1[%c6] : memref<61xf32, #tpu.memory_space<smem>>
    %c7 = arith.constant 7 : index
    %7 = memref.load %arg1[%c7] : memref<61xf32, #tpu.memory_space<smem>>
    %c8 = arith.constant 8 : index
    %8 = memref.load %arg1[%c8] : memref<61xf32, #tpu.memory_space<smem>>
    %c9 = arith.constant 9 : index
    %9 = memref.load %arg1[%c9] : memref<61xf32, #tpu.memory_space<smem>>
    %c10 = arith.constant 10 : index
    %10 = memref.load %arg1[%c10] : memref<61xf32, #tpu.memory_space<smem>>
    %c11 = arith.constant 11 : index
    %11 = memref.load %arg1[%c11] : memref<61xf32, #tpu.memory_space<smem>>
    %c12 = arith.constant 12 : index
    %12 = memref.load %arg1[%c12] : memref<61xf32, #tpu.memory_space<smem>>
    %c13 = arith.constant 13 : index
    %13 = memref.load %arg1[%c13] : memref<61xf32, #tpu.memory_space<smem>>
    %c14 = arith.constant 14 : index
    %14 = memref.load %arg1[%c14] : memref<61xf32, #tpu.memory_space<smem>>
    %c15 = arith.constant 15 : index
    %15 = memref.load %arg1[%c15] : memref<61xf32, #tpu.memory_space<smem>>
    %c16 = arith.constant 16 : index
    %16 = memref.load %arg1[%c16] : memref<61xf32, #tpu.memory_space<smem>>
    %c17 = arith.constant 17 : index
    %17 = memref.load %arg1[%c17] : memref<61xf32, #tpu.memory_space<smem>>
    %c18 = arith.constant 18 : index
    %18 = memref.load %arg1[%c18] : memref<61xf32, #tpu.memory_space<smem>>
    %c19 = arith.constant 19 : index
    %19 = memref.load %arg1[%c19] : memref<61xf32, #tpu.memory_space<smem>>
    %c20 = arith.constant 20 : index
    %20 = memref.load %arg1[%c20] : memref<61xf32, #tpu.memory_space<smem>>
    %c21 = arith.constant 21 : index
    %21 = memref.load %arg1[%c21] : memref<61xf32, #tpu.memory_space<smem>>
    %c22 = arith.constant 22 : index
    %22 = memref.load %arg1[%c22] : memref<61xf32, #tpu.memory_space<smem>>
    %c23 = arith.constant 23 : index
    %23 = memref.load %arg1[%c23] : memref<61xf32, #tpu.memory_space<smem>>
    %c24 = arith.constant 24 : index
    %24 = memref.load %arg1[%c24] : memref<61xf32, #tpu.memory_space<smem>>
    %c25 = arith.constant 25 : index
    %25 = memref.load %arg1[%c25] : memref<61xf32, #tpu.memory_space<smem>>
    %c26 = arith.constant 26 : index
    %26 = memref.load %arg1[%c26] : memref<61xf32, #tpu.memory_space<smem>>
    %c27 = arith.constant 27 : index
    %27 = memref.load %arg1[%c27] : memref<61xf32, #tpu.memory_space<smem>>
    %c28 = arith.constant 28 : index
    %28 = memref.load %arg1[%c28] : memref<61xf32, #tpu.memory_space<smem>>
    %c29 = arith.constant 29 : index
    %29 = memref.load %arg1[%c29] : memref<61xf32, #tpu.memory_space<smem>>
    %c30 = arith.constant 30 : index
    %30 = memref.load %arg1[%c30] : memref<61xf32, #tpu.memory_space<smem>>
    %c31 = arith.constant 31 : index
    %31 = memref.load %arg1[%c31] : memref<61xf32, #tpu.memory_space<smem>>
    %c32 = arith.constant 32 : index
    %32 = memref.load %arg1[%c32] : memref<61xf32, #tpu.memory_space<smem>>
    %c33 = arith.constant 33 : index
    %33 = memref.load %arg1[%c33] : memref<61xf32, #tpu.memory_space<smem>>
    %c34 = arith.constant 34 : index
    %34 = memref.load %arg1[%c34] : memref<61xf32, #tpu.memory_space<smem>>
    %c35 = arith.constant 35 : index
    %35 = memref.load %arg1[%c35] : memref<61xf32, #tpu.memory_space<smem>>
    %c36 = arith.constant 36 : index
    %36 = memref.load %arg1[%c36] : memref<61xf32, #tpu.memory_space<smem>>
    %c37 = arith.constant 37 : index
    %37 = memref.load %arg1[%c37] : memref<61xf32, #tpu.memory_space<smem>>
    %c38 = arith.constant 38 : index
    %38 = memref.load %arg1[%c38] : memref<61xf32, #tpu.memory_space<smem>>
    %c39 = arith.constant 39 : index
    %39 = memref.load %arg1[%c39] : memref<61xf32, #tpu.memory_space<smem>>
    %c40 = arith.constant 40 : index
    %40 = memref.load %arg1[%c40] : memref<61xf32, #tpu.memory_space<smem>>
    %c41 = arith.constant 41 : index
    %41 = memref.load %arg1[%c41] : memref<61xf32, #tpu.memory_space<smem>>
    %c42 = arith.constant 42 : index
    %42 = memref.load %arg1[%c42] : memref<61xf32, #tpu.memory_space<smem>>
    %c43 = arith.constant 43 : index
    %43 = memref.load %arg1[%c43] : memref<61xf32, #tpu.memory_space<smem>>
    %c44 = arith.constant 44 : index
    %44 = memref.load %arg1[%c44] : memref<61xf32, #tpu.memory_space<smem>>
    %c45 = arith.constant 45 : index
    %45 = memref.load %arg1[%c45] : memref<61xf32, #tpu.memory_space<smem>>
    %c46 = arith.constant 46 : index
    %46 = memref.load %arg1[%c46] : memref<61xf32, #tpu.memory_space<smem>>
    %c47 = arith.constant 47 : index
    %47 = memref.load %arg1[%c47] : memref<61xf32, #tpu.memory_space<smem>>
    %c48 = arith.constant 48 : index
    %48 = memref.load %arg1[%c48] : memref<61xf32, #tpu.memory_space<smem>>
    %c49 = arith.constant 49 : index
    %49 = memref.load %arg1[%c49] : memref<61xf32, #tpu.memory_space<smem>>
    %c50 = arith.constant 50 : index
    %50 = memref.load %arg1[%c50] : memref<61xf32, #tpu.memory_space<smem>>
    %c51 = arith.constant 51 : index
    %51 = memref.load %arg1[%c51] : memref<61xf32, #tpu.memory_space<smem>>
    %c52 = arith.constant 52 : index
    %52 = memref.load %arg1[%c52] : memref<61xf32, #tpu.memory_space<smem>>
    %c53 = arith.constant 53 : index
    %53 = memref.load %arg1[%c53] : memref<61xf32, #tpu.memory_space<smem>>
    %c54 = arith.constant 54 : index
    %54 = memref.load %arg1[%c54] : memref<61xf32, #tpu.memory_space<smem>>
    %c55 = arith.constant 55 : index
    %55 = memref.load %arg1[%c55] : memref<61xf32, #tpu.memory_space<smem>>
    %c56 = arith.constant 56 : index
    %56 = memref.load %arg1[%c56] : memref<61xf32, #tpu.memory_space<smem>>
    %c57 = arith.constant 57 : index
    %57 = memref.load %arg1[%c57] : memref<61xf32, #tpu.memory_space<smem>>
    %c58 = arith.constant 58 : index
    %58 = memref.load %arg1[%c58] : memref<61xf32, #tpu.memory_space<smem>>
    %c59 = arith.constant 59 : index
    %59 = memref.load %arg1[%c59] : memref<61xf32, #tpu.memory_space<smem>>
    %c60 = arith.constant 60 : index
    %60 = memref.load %arg1[%c60] : memref<61xf32, #tpu.memory_space<smem>>
    %c0_0 = arith.constant 0 : index
    %c0_1 = arith.constant 0 : index
    %c0_2 = arith.constant 0 : index
    %61 = vector.load %arg2[%c0_0, %c0_1, %c0_2] : memref<4x1x128xf32, #tpu.memory_space<vmem>>, vector<1x1x128xf32>
    %62 = vector.shape_cast %61 : vector<1x1x128xf32> to vector<1x128xf32>
    %c1_3 = arith.constant 1 : index
    %c0_4 = arith.constant 0 : index
    %c0_5 = arith.constant 0 : index
    %63 = vector.load %arg2[%c1_3, %c0_4, %c0_5] : memref<4x1x128xf32, #tpu.memory_space<vmem>>, vector<1x1x128xf32>
    %64 = vector.shape_cast %63 : vector<1x1x128xf32> to vector<1x128xf32>
    %c2_6 = arith.constant 2 : index
    %c0_7 = arith.constant 0 : index
    %c0_8 = arith.constant 0 : index
    %65 = vector.load %arg2[%c2_6, %c0_7, %c0_8] : memref<4x1x128xf32, #tpu.memory_space<vmem>>, vector<1x1x128xf32>
    %66 = vector.shape_cast %65 : vector<1x1x128xf32> to vector<1x128xf32>
    %c3_9 = arith.constant 3 : index
    %c0_10 = arith.constant 0 : index
    %c0_11 = arith.constant 0 : index
    %67 = vector.load %arg2[%c3_9, %c0_10, %c0_11] : memref<4x1x128xf32, #tpu.memory_space<vmem>>, vector<1x1x128xf32>
    %68 = vector.shape_cast %67 : vector<1x1x128xf32> to vector<1x128xf32>
    %69 = vector.broadcast %60 : f32 to vector<1x128xf32>
    %70 = vector.broadcast %0 : f32 to vector<1x128xf32>
    %71 = arith.mulf %62, %70 : vector<1x128xf32>
    %72 = vector.broadcast %1 : f32 to vector<1x128xf32>
    %73 = arith.mulf %64, %72 : vector<1x128xf32>
    %74 = arith.addf %71, %73 : vector<1x128xf32>
    %75 = vector.broadcast %2 : f32 to vector<1x128xf32>
    %76 = arith.mulf %66, %75 : vector<1x128xf32>
    %77 = arith.addf %74, %76 : vector<1x128xf32>
    %78 = vector.broadcast %3 : f32 to vector<1x128xf32>
    %79 = arith.mulf %68, %78 : vector<1x128xf32>
    %80 = arith.addf %77, %79 : vector<1x128xf32>
    %81 = vector.broadcast %40 : f32 to vector<1x128xf32>
    %82 = arith.addf %80, %81 : vector<1x128xf32>
    %cst = arith.constant 0.000000e+00 : f32
    %83 = vector.broadcast %cst : f32 to vector<1x128xf32>
    %84 = arith.maximumf %82, %83 : vector<1x128xf32>
    %85 = vector.broadcast %50 : f32 to vector<1x128xf32>
    %86 = arith.mulf %84, %85 : vector<1x128xf32>
    %87 = arith.addf %69, %86 : vector<1x128xf32>
    %88 = vector.broadcast %4 : f32 to vector<1x128xf32>
    %89 = arith.mulf %62, %88 : vector<1x128xf32>
    %90 = vector.broadcast %5 : f32 to vector<1x128xf32>
    %91 = arith.mulf %64, %90 : vector<1x128xf32>
    %92 = arith.addf %89, %91 : vector<1x128xf32>
    %93 = vector.broadcast %6 : f32 to vector<1x128xf32>
    %94 = arith.mulf %66, %93 : vector<1x128xf32>
    %95 = arith.addf %92, %94 : vector<1x128xf32>
    %96 = vector.broadcast %7 : f32 to vector<1x128xf32>
    %97 = arith.mulf %68, %96 : vector<1x128xf32>
    %98 = arith.addf %95, %97 : vector<1x128xf32>
    %99 = vector.broadcast %41 : f32 to vector<1x128xf32>
    %100 = arith.addf %98, %99 : vector<1x128xf32>
    %cst_12 = arith.constant 0.000000e+00 : f32
    %101 = vector.broadcast %cst_12 : f32 to vector<1x128xf32>
    %102 = arith.maximumf %100, %101 : vector<1x128xf32>
    %103 = vector.broadcast %51 : f32 to vector<1x128xf32>
    %104 = arith.mulf %102, %103 : vector<1x128xf32>
    %105 = arith.addf %87, %104 : vector<1x128xf32>
    %106 = vector.broadcast %8 : f32 to vector<1x128xf32>
    %107 = arith.mulf %62, %106 : vector<1x128xf32>
    %108 = vector.broadcast %9 : f32 to vector<1x128xf32>
    %109 = arith.mulf %64, %108 : vector<1x128xf32>
    %110 = arith.addf %107, %109 : vector<1x128xf32>
    %111 = vector.broadcast %10 : f32 to vector<1x128xf32>
    %112 = arith.mulf %66, %111 : vector<1x128xf32>
    %113 = arith.addf %110, %112 : vector<1x128xf32>
    %114 = vector.broadcast %11 : f32 to vector<1x128xf32>
    %115 = arith.mulf %68, %114 : vector<1x128xf32>
    %116 = arith.addf %113, %115 : vector<1x128xf32>
    %117 = vector.broadcast %42 : f32 to vector<1x128xf32>
    %118 = arith.addf %116, %117 : vector<1x128xf32>
    %cst_13 = arith.constant 0.000000e+00 : f32
    %119 = vector.broadcast %cst_13 : f32 to vector<1x128xf32>
    %120 = arith.maximumf %118, %119 : vector<1x128xf32>
    %121 = vector.broadcast %52 : f32 to vector<1x128xf32>
    %122 = arith.mulf %120, %121 : vector<1x128xf32>
    %123 = arith.addf %105, %122 : vector<1x128xf32>
    %124 = vector.broadcast %12 : f32 to vector<1x128xf32>
    %125 = arith.mulf %62, %124 : vector<1x128xf32>
    %126 = vector.broadcast %13 : f32 to vector<1x128xf32>
    %127 = arith.mulf %64, %126 : vector<1x128xf32>
    %128 = arith.addf %125, %127 : vector<1x128xf32>
    %129 = vector.broadcast %14 : f32 to vector<1x128xf32>
    %130 = arith.mulf %66, %129 : vector<1x128xf32>
    %131 = arith.addf %128, %130 : vector<1x128xf32>
    %132 = vector.broadcast %15 : f32 to vector<1x128xf32>
    %133 = arith.mulf %68, %132 : vector<1x128xf32>
    %134 = arith.addf %131, %133 : vector<1x128xf32>
    %135 = vector.broadcast %43 : f32 to vector<1x128xf32>
    %136 = arith.addf %134, %135 : vector<1x128xf32>
    %cst_14 = arith.constant 0.000000e+00 : f32
    %137 = vector.broadcast %cst_14 : f32 to vector<1x128xf32>
    %138 = arith.maximumf %136, %137 : vector<1x128xf32>
    %139 = vector.broadcast %53 : f32 to vector<1x128xf32>
    %140 = arith.mulf %138, %139 : vector<1x128xf32>
    %141 = arith.addf %123, %140 : vector<1x128xf32>
    %142 = vector.broadcast %16 : f32 to vector<1x128xf32>
    %143 = arith.mulf %62, %142 : vector<1x128xf32>
    %144 = vector.broadcast %17 : f32 to vector<1x128xf32>
    %145 = arith.mulf %64, %144 : vector<1x128xf32>
    %146 = arith.addf %143, %145 : vector<1x128xf32>
    %147 = vector.broadcast %18 : f32 to vector<1x128xf32>
    %148 = arith.mulf %66, %147 : vector<1x128xf32>
    %149 = arith.addf %146, %148 : vector<1x128xf32>
    %150 = vector.broadcast %19 : f32 to vector<1x128xf32>
    %151 = arith.mulf %68, %150 : vector<1x128xf32>
    %152 = arith.addf %149, %151 : vector<1x128xf32>
    %153 = vector.broadcast %44 : f32 to vector<1x128xf32>
    %154 = arith.addf %152, %153 : vector<1x128xf32>
    %cst_15 = arith.constant 0.000000e+00 : f32
    %155 = vector.broadcast %cst_15 : f32 to vector<1x128xf32>
    %156 = arith.maximumf %154, %155 : vector<1x128xf32>
    %157 = vector.broadcast %54 : f32 to vector<1x128xf32>
    %158 = arith.mulf %156, %157 : vector<1x128xf32>
    %159 = arith.addf %141, %158 : vector<1x128xf32>
    %160 = vector.broadcast %20 : f32 to vector<1x128xf32>
    %161 = arith.mulf %62, %160 : vector<1x128xf32>
    %162 = vector.broadcast %21 : f32 to vector<1x128xf32>
    %163 = arith.mulf %64, %162 : vector<1x128xf32>
    %164 = arith.addf %161, %163 : vector<1x128xf32>
    %165 = vector.broadcast %22 : f32 to vector<1x128xf32>
    %166 = arith.mulf %66, %165 : vector<1x128xf32>
    %167 = arith.addf %164, %166 : vector<1x128xf32>
    %168 = vector.broadcast %23 : f32 to vector<1x128xf32>
    %169 = arith.mulf %68, %168 : vector<1x128xf32>
    %170 = arith.addf %167, %169 : vector<1x128xf32>
    %171 = vector.broadcast %45 : f32 to vector<1x128xf32>
    %172 = arith.addf %170, %171 : vector<1x128xf32>
    %cst_16 = arith.constant 0.000000e+00 : f32
    %173 = vector.broadcast %cst_16 : f32 to vector<1x128xf32>
    %174 = arith.maximumf %172, %173 : vector<1x128xf32>
    %175 = vector.broadcast %55 : f32 to vector<1x128xf32>
    %176 = arith.mulf %174, %175 : vector<1x128xf32>
    %177 = arith.addf %159, %176 : vector<1x128xf32>
    %178 = vector.broadcast %24 : f32 to vector<1x128xf32>
    %179 = arith.mulf %62, %178 : vector<1x128xf32>
    %180 = vector.broadcast %25 : f32 to vector<1x128xf32>
    %181 = arith.mulf %64, %180 : vector<1x128xf32>
    %182 = arith.addf %179, %181 : vector<1x128xf32>
    %183 = vector.broadcast %26 : f32 to vector<1x128xf32>
    %184 = arith.mulf %66, %183 : vector<1x128xf32>
    %185 = arith.addf %182, %184 : vector<1x128xf32>
    %186 = vector.broadcast %27 : f32 to vector<1x128xf32>
    %187 = arith.mulf %68, %186 : vector<1x128xf32>
    %188 = arith.addf %185, %187 : vector<1x128xf32>
    %189 = vector.broadcast %46 : f32 to vector<1x128xf32>
    %190 = arith.addf %188, %189 : vector<1x128xf32>
    %cst_17 = arith.constant 0.000000e+00 : f32
    %191 = vector.broadcast %cst_17 : f32 to vector<1x128xf32>
    %192 = arith.maximumf %190, %191 : vector<1x128xf32>
    %193 = vector.broadcast %56 : f32 to vector<1x128xf32>
    %194 = arith.mulf %192, %193 : vector<1x128xf32>
    %195 = arith.addf %177, %194 : vector<1x128xf32>
    %196 = vector.broadcast %28 : f32 to vector<1x128xf32>
    %197 = arith.mulf %62, %196 : vector<1x128xf32>
    %198 = vector.broadcast %29 : f32 to vector<1x128xf32>
    %199 = arith.mulf %64, %198 : vector<1x128xf32>
    %200 = arith.addf %197, %199 : vector<1x128xf32>
    %201 = vector.broadcast %30 : f32 to vector<1x128xf32>
    %202 = arith.mulf %66, %201 : vector<1x128xf32>
    %203 = arith.addf %200, %202 : vector<1x128xf32>
    %204 = vector.broadcast %31 : f32 to vector<1x128xf32>
    %205 = arith.mulf %68, %204 : vector<1x128xf32>
    %206 = arith.addf %203, %205 : vector<1x128xf32>
    %207 = vector.broadcast %47 : f32 to vector<1x128xf32>
    %208 = arith.addf %206, %207 : vector<1x128xf32>
    %cst_18 = arith.constant 0.000000e+00 : f32
    %209 = vector.broadcast %cst_18 : f32 to vector<1x128xf32>
    %210 = arith.maximumf %208, %209 : vector<1x128xf32>
    %211 = vector.broadcast %57 : f32 to vector<1x128xf32>
    %212 = arith.mulf %210, %211 : vector<1x128xf32>
    %213 = arith.addf %195, %212 : vector<1x128xf32>
    %214 = vector.broadcast %32 : f32 to vector<1x128xf32>
    %215 = arith.mulf %62, %214 : vector<1x128xf32>
    %216 = vector.broadcast %33 : f32 to vector<1x128xf32>
    %217 = arith.mulf %64, %216 : vector<1x128xf32>
    %218 = arith.addf %215, %217 : vector<1x128xf32>
    %219 = vector.broadcast %34 : f32 to vector<1x128xf32>
    %220 = arith.mulf %66, %219 : vector<1x128xf32>
    %221 = arith.addf %218, %220 : vector<1x128xf32>
    %222 = vector.broadcast %35 : f32 to vector<1x128xf32>
    %223 = arith.mulf %68, %222 : vector<1x128xf32>
    %224 = arith.addf %221, %223 : vector<1x128xf32>
    %225 = vector.broadcast %48 : f32 to vector<1x128xf32>
    %226 = arith.addf %224, %225 : vector<1x128xf32>
    %cst_19 = arith.constant 0.000000e+00 : f32
    %227 = vector.broadcast %cst_19 : f32 to vector<1x128xf32>
    %228 = arith.maximumf %226, %227 : vector<1x128xf32>
    %229 = vector.broadcast %58 : f32 to vector<1x128xf32>
    %230 = arith.mulf %228, %229 : vector<1x128xf32>
    %231 = arith.addf %213, %230 : vector<1x128xf32>
    %232 = vector.broadcast %36 : f32 to vector<1x128xf32>
    %233 = arith.mulf %62, %232 : vector<1x128xf32>
    %234 = vector.broadcast %37 : f32 to vector<1x128xf32>
    %235 = arith.mulf %64, %234 : vector<1x128xf32>
    %236 = arith.addf %233, %235 : vector<1x128xf32>
    %237 = vector.broadcast %38 : f32 to vector<1x128xf32>
    %238 = arith.mulf %66, %237 : vector<1x128xf32>
    %239 = arith.addf %236, %238 : vector<1x128xf32>
    %240 = vector.broadcast %39 : f32 to vector<1x128xf32>
    %241 = arith.mulf %68, %240 : vector<1x128xf32>
    %242 = arith.addf %239, %241 : vector<1x128xf32>
    %243 = vector.broadcast %49 : f32 to vector<1x128xf32>
    %244 = arith.addf %242, %243 : vector<1x128xf32>
    %cst_20 = arith.constant 0.000000e+00 : f32
    %245 = vector.broadcast %cst_20 : f32 to vector<1x128xf32>
    %246 = arith.maximumf %244, %245 : vector<1x128xf32>
    %247 = vector.broadcast %59 : f32 to vector<1x128xf32>
    %248 = arith.mulf %246, %247 : vector<1x128xf32>
    %249 = arith.addf %231, %248 : vector<1x128xf32>
    %cst_21 = arith.constant 0.000000e+00 : f32
    %250 = vector.broadcast %cst_21 : f32 to vector<1x128xf32>
    %251 = arith.subf %250, %249 : vector<1x128xf32>
    %252 = math.exp %251 : vector<1x128xf32>
    %cst_22 = arith.constant 1.000000e+00 : f32
    %253 = vector.broadcast %cst_22 : f32 to vector<1x128xf32>
    %254 = arith.addf %253, %252 : vector<1x128xf32>
    %255 = tpu.reciprocal %254 {approx = true} : vector<1x128xf32> -> vector<1x128xf32>
    %c0_23 = arith.constant 0 : index
    %c0_24 = arith.constant 0 : index
    %256 = vector.load %arg3[%c0_23, %c0_24] : memref<1x128xf32, #tpu.memory_space<vmem>>, vector<1x128xf32>
    tpu.vector_store %arg3[%c0_23, %c0_24], %255 {strides = array<i32>} : memref<1x128xf32, #tpu.memory_space<vmem>>, vector<1x128xf32>,
    return
  }
  func.func @transform_0(%arg0: i32) -> i32 {
    %c0_i32 = arith.constant 0 : i32
    %c0_i32_0 = arith.constant 0 : i32
    return %c0_i32 : i32
  }
  func.func @transform_1(%arg0: i32) -> (i32, i32, i32) {
    %c0_i32 = arith.constant 0 : i32
    %c0_i32_0 = arith.constant 0 : i32
    %c0_i32_1 = arith.constant 0 : i32
    return %c0_i32, %arg0, %c0_i32_0 : i32, i32, i32
  }
  func.func @transform_2(%arg0: i32) -> (i32, i32) {
    %c0_i32 = arith.constant 0 : i32
    %c0_i32_0 = arith.constant 0 : i32
    return %arg0, %c0_i32 : i32, i32
  }
}

</mosaic_0001>

<llo_original>
// kernel: tpu_custom_call.1
$region0: #{tpu_custom_call.1}
  #allocation0 [shape = 'u32[]', space=smem, size = 0x4, offset = 0x4, fixed_abs, tag = 'smem constant byte address 0x4 - core index']
  #allocation1 [shape = 'u32[144,128]{1,0:T(1,128)}', space=vmem, size = 0x12000, scoped, tag = 'internal scratch']
  %s0 = inlined_call_operand.hbm [shape: f32[61], index: 0, kind: input, shape index: {}]
  %s1 = inlined_call_operand.hbm [shape: f32[4,1,128], index: 1, kind: input, shape index: {}]
  %s2 = inlined_call_operand.hbm [shape: f32[1,128], index: 2, kind: output, shape index: {}]
  %s3 = sld [smem:[#allocation0]]
  $region26: #{tpu_custom_call.1} parent=0
    _
  %s5 = ssub.s32 1, %s3
  %s6 = scalar_select 0, %s5, %s3
  $region1: #{tpu_custom_call.1} parent=0
    #allocation2 [shape = 'u8[512]{0}', space=smem, size = 0x200, scoped, tag = 'input window, operand 0, single buffered']
    #allocation3 [shape = 's32[1]{0}', space=sflag, size = 0x4, scoped, tag = 'scoped memory for tpu_custom_call.1']
    #allocation4 [shape = 's32[1]{0}', space=sflag, size = 0x4, scoped, tag = 'scoped memory for tpu_custom_call.1']
    #allocation5 [shape = 's32[1]{0}', space=sflag, size = 0x4, scoped, tag = 'scoped memory for tpu_custom_call.1']
    #allocation6 [shape = 'u8[2048]{0}', space=vmem, size = 0x800, scoped, tag = 'input window, operand 1, single buffered']
    #allocation7 [shape = 'u8[512]{0}', space=vmem, size = 0x400, scoped, tag = 'output window, operand 0, single buffered']
    %7 = vsyncpa [#allocation5], 0
    %8 = vsyncpa [#allocation3], 0
    %9 = vsyncpa [#allocation4], 0
    // Predicated region
    $region2: #{tpu_custom_call.1} parent=1 // pred_check
      _
    $region3: #{tpu_custom_call.1} parent=1 // pred_check_branch
      %11 = sbr.rel (0) target = $region5
    $region4: #{tpu_custom_call.1} parent=1 // pred_region
      %s13 = ssub.s32 16, 16
      %14 = vsyncadd [#allocation5], %s13
      %17 = dma.hbm_to_smem %s0, 16, [#allocation2], [#allocation5]
    $region5: #{tpu_custom_call.1} parent=1 // pred_fallthru
      _
    // Predicated region
    $region6: #{tpu_custom_call.1} parent=1 // pred_check
      _
    $region7: #{tpu_custom_call.1} parent=1 // pred_check_branch
      %19 = sbr.rel (0) target = $region9
    $region8: #{tpu_custom_call.1} parent=1 // pred_region
      %s21 = ssub.s32 64, 64
      %22 = vsyncadd [#allocation3], %s21
      %s23 = sshll.u32 [#allocation6], 4
      %s24 = int_to_ptr.vmem [resolvable:$true] %s23
      %29 = dma.hbm_to_vmem [thread:$0]  %s1, 64, %s24, [#allocation3], 16, 16, 1
    $region9: #{tpu_custom_call.1} parent=1 // pred_fallthru
      _
    // Predicated region
    $region10: #{tpu_custom_call.1} parent=1 // pred_check
      _
    $region11: #{tpu_custom_call.1} parent=1 // pred_check_branch
      %31 = sbr.rel (0) target = $region13
    $region12: #{tpu_custom_call.1} parent=1 // pred_region
      %32 = dma.done [#allocation5], 16
    $region13: #{tpu_custom_call.1} parent=1 // pred_fallthru
      _
    // Predicated region
    $region14: #{tpu_custom_call.1} parent=1 // pred_check
      _
    $region15: #{tpu_custom_call.1} parent=1 // pred_check_branch
      %34 = sbr.rel (0) target = $region17
    $region16: #{tpu_custom_call.1} parent=1 // pred_region
      %35 = dma.done [#allocation3], 64
    $region17: #{tpu_custom_call.1} parent=1 // pred_fallthru
      _
    %36 = sfence
    %s37 = sld [smem:[#allocation2]]
    %s38 = sld [smem:[#allocation2 + $0x1]]
    %s39 = sld [smem:[#allocation2 + $0x2]]
    %s40 = sld [smem:[#allocation2 + $0x3]]
    %s41 = sld [smem:[#allocation2 + $0x4]]
    %s42 = sld [smem:[#allocation2 + $0x5]]
    %s43 = sld [smem:[#allocation2 + $0x6]]
    %s44 = sld [smem:[#allocation2 + $0x7]]
    %s45 = sld [smem:[#allocation2 + $0x8]]
    %s46 = sld [smem:[#allocation2 + $0x9]]
    %s47 = sld [smem:[#allocation2 + $0xa]]
    %s48 = sld [smem:[#allocation2 + $0xb]]
    %s49 = sld [smem:[#allocation2 + $0xc]]
    %s50 = sld [smem:[#allocation2 + $0xd]]
    %s51 = sld [smem:[#allocation2 + $0xe]]
    %s52 = sld [smem:[#allocation2 + $0xf]]
    %s53 = sld [smem:[#allocation2 + $0x10]]
    %s54 = sld [smem:[#allocation2 + $0x11]]
    %s55 = sld [smem:[#allocation2 + $0x12]]
    %s56 = sld [smem:[#allocation2 + $0x13]]
    %s57 = sld [smem:[#allocation2 + $0x14]]
    %s58 = sld [smem:[#allocation2 + $0x15]]
    %s59 = sld [smem:[#allocation2 + $0x16]]
    %s60 = sld [smem:[#allocation2 + $0x17]]
    %s61 = sld [smem:[#allocation2 + $0x18]]
    %s62 = sld [smem:[#allocation2 + $0x19]]
    %s63 = sld [smem:[#allocation2 + $0x1a]]
    %s64 = sld [smem:[#allocation2 + $0x1b]]
    %s65 = sld [smem:[#allocation2 + $0x1c]]
    %s66 = sld [smem:[#allocation2 + $0x1d]]
    %s67 = sld [smem:[#allocation2 + $0x1e]]
    %s68 = sld [smem:[#allocation2 + $0x1f]]
    %s69 = sld [smem:[#allocation2 + $0x20]]
    %s70 = sld [smem:[#allocation2 + $0x21]]
    %s71 = sld [smem:[#allocation2 + $0x22]]
    %s72 = sld [smem:[#allocation2 + $0x23]]
    %s73 = sld [smem:[#allocation2 + $0x24]]
    %s74 = sld [smem:[#allocation2 + $0x25]]
    %s75 = sld [smem:[#allocation2 + $0x26]]
    %s76 = sld [smem:[#allocation2 + $0x27]]
    %s77 = sld [smem:[#allocation2 + $0x28]]
    %s78 = sld [smem:[#allocation2 + $0x29]]
    %s79 = sld [smem:[#allocation2 + $0x2a]]
    %s80 = sld [smem:[#allocation2 + $0x2b]]
    %s81 = sld [smem:[#allocation2 + $0x2c]]
    %s82 = sld [smem:[#allocation2 + $0x2d]]
    %s83 = sld [smem:[#allocation2 + $0x2e]]
    %s84 = sld [smem:[#allocation2 + $0x2f]]
    %s85 = sld [smem:[#allocation2 + $0x30]]
    %s86 = sld [smem:[#allocation2 + $0x31]]
    %s87 = sld [smem:[#allocation2 + $0x32]]
    %s88 = sld [smem:[#allocation2 + $0x33]]
    %s89 = sld [smem:[#allocation2 + $0x34]]
    %s90 = sld [smem:[#allocation2 + $0x35]]
    %s91 = sld [smem:[#allocation2 + $0x36]]
    %s92 = sld [smem:[#allocation2 + $0x37]]
    %s93 = sld [smem:[#allocation2 + $0x38]]
    %s94 = sld [smem:[#allocation2 + $0x39]]
    %s95 = sld [smem:[#allocation2 + $0x3a]]
    %s96 = sld [smem:[#allocation2 + $0x3b]]
    %s97 = sld [smem:[#allocation2 + $0x3c]]
    %v98 = vld [vmem:[#allocation6] sm:$0x1]
    %s99 = scalar_lea.vmem [#allocation6], 1
    %v100 = vld [vmem:[%s99] sm:$0x1]
    %s101 = scalar_lea.vmem [#allocation6], 2
    %v102 = vld [vmem:[%s101] sm:$0x1]
    %s103 = scalar_lea.vmem [#allocation6], 3
    %v104 = vld [vmem:[%s103] sm:$0x1]
    %v105 = vstv %s97
    %v106 = vstv %s37
    %v107 = vmul.f32 %v98, %v106
    %v108 = vstv %s38
    %v109 = vmul.f32 %v100, %v108
    %v110 = vadd.f32 %v107, %v109
    %v111 = vstv %s39
    %v112 = vmul.f32 %v102, %v111
    %v113 = vadd.f32 %v110, %v112
    %v114 = vstv %s40
    %v115 = vmul.f32 %v104, %v114
    %v116 = vadd.f32 %v113, %v115
    %v117 = vstv %s77
    %v118 = vadd.f32 %v116, %v117
    %v119 = vmax.f32 %v118, 0.0
    %v120 = vstv %s87
    %v121 = vmul.f32 %v119, %v120
    %v122 = vadd.f32 %v105, %v121
    %v123 = vstv %s41
    %v124 = vmul.f32 %v98, %v123
    %v125 = vstv %s42
    %v126 = vmul.f32 %v100, %v125
    %v127 = vadd.f32 %v124, %v126
    %v128 = vstv %s43
    %v129 = vmul.f32 %v102, %v128
    %v130 = vadd.f32 %v127, %v129
    %v131 = vstv %s44
    %v132 = vmul.f32 %v104, %v131
    %v133 = vadd.f32 %v130, %v132
    %v134 = vstv %s78
    %v135 = vadd.f32 %v133, %v134
    %v136 = vmax.f32 %v135, 0.0
    %v137 = vstv %s88
    %v138 = vmul.f32 %v136, %v137
    %v139 = vadd.f32 %v122, %v138
    %v140 = vstv %s45
    %v141 = vmul.f32 %v98, %v140
    %v142 = vstv %s46
    %v143 = vmul.f32 %v100, %v142
    %v144 = vadd.f32 %v141, %v143
    %v145 = vstv %s47
    %v146 = vmul.f32 %v102, %v145
    %v147 = vadd.f32 %v144, %v146
    %v148 = vstv %s48
    %v149 = vmul.f32 %v104, %v148
    %v150 = vadd.f32 %v147, %v149
    %v151 = vstv %s79
    %v152 = vadd.f32 %v150, %v151
    %v153 = vmax.f32 %v152, 0.0
    %v154 = vstv %s89
    %v155 = vmul.f32 %v153, %v154
    %v156 = vadd.f32 %v139, %v155
    %v157 = vstv %s49
    %v158 = vmul.f32 %v98, %v157
    %v159 = vstv %s50
    %v160 = vmul.f32 %v100, %v159
    %v161 = vadd.f32 %v158, %v160
    %v162 = vstv %s51
    %v163 = vmul.f32 %v102, %v162
    %v164 = vadd.f32 %v161, %v163
    %v165 = vstv %s52
    %v166 = vmul.f32 %v104, %v165
    %v167 = vadd.f32 %v164, %v166
    %v168 = vstv %s80
    %v169 = vadd.f32 %v167, %v168
    %v170 = vmax.f32 %v169, 0.0
    %v171 = vstv %s90
    %v172 = vmul.f32 %v170, %v171
    %v173 = vadd.f32 %v156, %v172
    %v174 = vstv %s53
    %v175 = vmul.f32 %v98, %v174
    %v176 = vstv %s54
    %v177 = vmul.f32 %v100, %v176
    %v178 = vadd.f32 %v175, %v177
    %v179 = vstv %s55
    %v180 = vmul.f32 %v102, %v179
    %v181 = vadd.f32 %v178, %v180
    %v182 = vstv %s56
    %v183 = vmul.f32 %v104, %v182
    %v184 = vadd.f32 %v181, %v183
    %v185 = vstv %s81
    %v186 = vadd.f32 %v184, %v185
    %v187 = vmax.f32 %v186, 0.0
    %v188 = vstv %s91
    %v189 = vmul.f32 %v187, %v188
    %v190 = vadd.f32 %v173, %v189
    %v191 = vstv %s57
    %v192 = vmul.f32 %v98, %v191
    %v193 = vstv %s58
    %v194 = vmul.f32 %v100, %v193
    %v195 = vadd.f32 %v192, %v194
    %v196 = vstv %s59
    %v197 = vmul.f32 %v102, %v196
    %v198 = vadd.f32 %v195, %v197
    %v199 = vstv %s60
    %v200 = vmul.f32 %v104, %v199
    %v201 = vadd.f32 %v198, %v200
    %v202 = vstv %s82
    %v203 = vadd.f32 %v201, %v202
    %v204 = vmax.f32 %v203, 0.0
    %v205 = vstv %s92
    %v206 = vmul.f32 %v204, %v205
    %v207 = vadd.f32 %v190, %v206
    %v208 = vstv %s61
    %v209 = vmul.f32 %v98, %v208
    %v210 = vstv %s62
    %v211 = vmul.f32 %v100, %v210
    %v212 = vadd.f32 %v209, %v211
    %v213 = vstv %s63
    %v214 = vmul.f32 %v102, %v213
    %v215 = vadd.f32 %v212, %v214
    %v216 = vstv %s64
    %v217 = vmul.f32 %v104, %v216
    %v218 = vadd.f32 %v215, %v217
    %v219 = vstv %s83
    %v220 = vadd.f32 %v218, %v219
    %v221 = vmax.f32 %v220, 0.0
    %v222 = vstv %s93
    %v223 = vmul.f32 %v221, %v222
    %v224 = vadd.f32 %v207, %v223
    %v225 = vstv %s65
    %v226 = vmul.f32 %v98, %v225
    %v227 = vstv %s66
    %v228 = vmul.f32 %v100, %v227
    %v229 = vadd.f32 %v226, %v228
    %v230 = vstv %s67
    %v231 = vmul.f32 %v102, %v230
    %v232 = vadd.f32 %v229, %v231
    %v233 = vstv %s68
    %v234 = vmul.f32 %v104, %v233
    %v235 = vadd.f32 %v232, %v234
    %v236 = vstv %s84
    %v237 = vadd.f32 %v235, %v236
    %v238 = vmax.f32 %v237, 0.0
    %v239 = vstv %s94
    %v240 = vmul.f32 %v238, %v239
    %v241 = vadd.f32 %v224, %v240
    %v242 = vstv %s69
    %v243 = vmul.f32 %v98, %v242
    %v244 = vstv %s70
    %v245 = vmul.f32 %v100, %v244
    %v246 = vadd.f32 %v243, %v245
    %v247 = vstv %s71
    %v248 = vmul.f32 %v102, %v247
    %v249 = vadd.f32 %v246, %v248
    %v250 = vstv %s72
    %v251 = vmul.f32 %v104, %v250
    %v252 = vadd.f32 %v249, %v251
    %v253 = vstv %s85
    %v254 = vadd.f32 %v252, %v253
    %v255 = vmax.f32 %v254, 0.0
    %v256 = vstv %s95
    %v257 = vmul.f32 %v255, %v256
    %v258 = vadd.f32 %v241, %v257
    %v259 = vstv %s73
    %v260 = vmul.f32 %v98, %v259
    %v261 = vstv %s74
    %v262 = vmul.f32 %v100, %v261
    %v263 = vadd.f32 %v260, %v262
    %v264 = vstv %s75
    %v265 = vmul.f32 %v102, %v264
    %v266 = vadd.f32 %v263, %v265
    %v267 = vstv %s76
    %v268 = vmul.f32 %v104, %v267
    %v269 = vadd.f32 %v266, %v268
    %v270 = vstv %s86
    %v271 = vadd.f32 %v269, %v270
    %v272 = vmax.f32 %v271, 0.0
    %v273 = vstv %s96
    %v274 = vmul.f32 %v272, %v273
    %v275 = vadd.f32 %v258, %v274
    %v276 = vsub.f32 0.0, %v275
    %v277 = vmul.f32 %v276, 1.442695
    %v278 = vpow.pop %v277
    %v279 = vadd.f32 %v278, 1.0
    %v280 = vrcp.pop %v279
    %281 = vst [vmem:[#allocation7] sm:$0x1] %v280
    // Predicated region
    $region18: #{tpu_custom_call.1} parent=1 // pred_check
      _
    $region19: #{tpu_custom_call.1} parent=1 // pred_check_branch
      %283 = sbr.rel (0) target = $region21
    $region20: #{tpu_custom_call.1} parent=1 // pred_region
      %s285 = ssub.s32 16, 16
      %286 = vsyncadd [#allocation4], %s285
      %s288 = sshll.u32 [#allocation7], 4
      %s289 = int_to_ptr.vmem [resolvable:$true] %s288
      %291 = dma.vmem_to_hbm [thread:$0]  %s289, 16, %s2, [#allocation4]
    $region21: #{tpu_custom_call.1} parent=1 // pred_fallthru
      _
    // Predicated region
    $region22: #{tpu_custom_call.1} parent=1 // pred_check
      _
    $region23: #{tpu_custom_call.1} parent=1 // pred_check_branch
      %293 = sbr.rel (0) target = $region25
    $region24: #{tpu_custom_call.1} parent=1 // pred_region
      %294 = dma.done [#allocation4], 16
    $region25: #{tpu_custom_call.1} parent=1 // pred_fallthru
      _
    %295 = vsyncpa [#allocation3], 1
    %296 = vsyncpa [#allocation4], 1
    %297 = vsyncpa [#allocation5], 1

</llo_original>
